<compile_context>
chip_gen: v6e
topology: v6e:2x2x1
jax: 0.10.0
libtpu: 0.0.40
codegen_flags: <defaults>
</compile_context>

<pallas_src>
import jax
import jax.numpy as jnp
from jax.experimental import pallas as pl
from jax.experimental.pallas import tpu as pltpu


def _round_up(n, m):
    return ((n + m - 1) // m) * m


def _adapter_kernel(x_ref, g_ref, b_ref, w_in_ref, b_in_ref,
                    w_out_ref, b_out_ref, o_ref):
    # x_ref:     (tm, D)   input rows (residual source)
    # g_ref:     (1, D)    LayerNorm gamma
    # b_ref:     (1, D)    LayerNorm beta
    # w_in_ref:  (D, Hd)   in_linear weight, already transposed (x @ w_in)
    # b_in_ref:  (1, Hd)   in_linear bias
    # w_out_ref: (Hd, D)   out_linear weight, already transposed (h @ w_out)
    # b_out_ref: (1, D)    out_linear bias
    # o_ref:     (tm, D)   output rows
    x = x_ref[...]
    xf = x.astype(jnp.float32)

    # LayerNorm over last axis, eps=1e-12 (biased variance, like torch.nn.LayerNorm)
    mean = jnp.mean(xf, axis=-1, keepdims=True)
    cent = xf - mean
    var = jnp.mean(cent * cent, axis=-1, keepdims=True)
    hn = cent * jax.lax.rsqrt(var + 1e-12)
    hn = hn * g_ref[...].astype(jnp.float32) + b_ref[...].astype(jnp.float32)

    # in_linear + ReLU (matmul in weight dtype, f32 accumulate)
    h = jnp.dot(hn.astype(w_in_ref.dtype), w_in_ref[...],
                preferred_element_type=jnp.float32)
    h = h + b_in_ref[...].astype(jnp.float32)
    h = jnp.maximum(h, 0.0)

    # out_linear
    y = jnp.dot(h.astype(w_out_ref.dtype), w_out_ref[...],
                preferred_element_type=jnp.float32)
    y = y + b_out_ref[...].astype(jnp.float32)

    # residual add
    o_ref[...] = (y + xf).astype(o_ref.dtype)


def residual_adapter(x, params, *, tm=256):
    """x: [B, S, D] (or [N, D]) -> same shape."""
    orig_shape = x.shape
    D = orig_shape[-1]
    N = 1
    for s in orig_shape[:-1]:
        N *= s
    x2 = x.reshape(N, D)

    w_in = params["in_w"].T            # (D, Hd)  so kernel does x @ w_in
    b_in = params["in_b"].reshape(1, -1)
    w_out = params["out_w"].T          # (Hd, D)
    b_out = params["out_b"].reshape(1, D)
    gamma = params["ln_gamma"].reshape(1, D)
    beta = params["ln_beta"].reshape(1, D)
    Hd = w_in.shape[1]

    # Row tile: large for MXU occupancy, clamped for tiny inputs; pad + slice
    # instead of asserting divisibility.
    tm_eff = min(tm, _round_up(N, 8))
    n_pad = _round_up(N, tm_eff)
    if n_pad != N:
        x2 = jnp.pad(x2, ((0, n_pad - N), (0, 0)))

    out = pl.pallas_call(
        _adapter_kernel,
        out_shape=jax.ShapeDtypeStruct((n_pad, D), x.dtype),
        grid_spec=pltpu.PrefetchScalarGridSpec(
            num_scalar_prefetch=0,
            grid=(n_pad // tm_eff,),
            in_specs=[
                pl.BlockSpec((tm_eff, D), lambda i: (i, 0)),   # x rows
                pl.BlockSpec((1, D), lambda i: (0, 0)),        # ln gamma
                pl.BlockSpec((1, D), lambda i: (0, 0)),        # ln beta
                pl.BlockSpec((D, Hd), lambda i: (0, 0)),       # in_linear weight
                pl.BlockSpec((1, Hd), lambda i: (0, 0)),       # in_linear bias
                pl.BlockSpec((Hd, D), lambda i: (0, 0)),       # out_linear weight
                pl.BlockSpec((1, D), lambda i: (0, 0)),        # out_linear bias
            ],
            out_specs=pl.BlockSpec((tm_eff, D), lambda i: (i, 0)),
        ),
        compiler_params=pltpu.CompilerParams(
            dimension_semantics=("parallel",)),
    )(x2, gamma, beta, w_in, b_in, w_out, b_out)

    if n_pad != N:
        out = out[:N]
    return out.reshape(orig_shape)


def _reference(x, params):
    """Plain-JAX reference mirroring the PyTorch module exactly."""
    xf = x.astype(jnp.float32)
    mean = jnp.mean(xf, axis=-1, keepdims=True)
    var = jnp.mean((xf - mean) ** 2, axis=-1, keepdims=True)
    h = (xf - mean) / jnp.sqrt(var + 1e-12)
    h = h * params["ln_gamma"] + params["ln_beta"]
    h = h @ params["in_w"].T.astype(jnp.float32) + params["in_b"]
    h = jnp.maximum(h, 0.0)
    y = h @ params["out_w"].T.astype(jnp.float32) + params["out_b"]
    return (y + xf).astype(x.dtype)


if __name__ == "__main__":
    B, S, D, Hd = 2, 8, 32, 64   # batch, seq, input_dim, hidden_dim

    key = jax.random.PRNGKey(0)
    k_x, k_wi, k_bi, k_wo, k_bo = jax.random.split(key, 5)

    x = jax.random.normal(k_x, (B, S, D), dtype=jnp.float32)

    params = {
        "ln_gamma": jnp.ones((D,), dtype=jnp.float32),
        "ln_beta": jnp.zeros((D,), dtype=jnp.float32),
        "in_w": jax.random.normal(k_wi, (Hd, D), dtype=jnp.float32) * 0.05,
        "in_b": jax.random.normal(k_bi, (Hd,), dtype=jnp.float32) * 0.01,
        "out_w": jax.random.normal(k_wo, (D, Hd), dtype=jnp.float32) * 0.05,
        "out_b": jax.random.normal(k_bo, (D,), dtype=jnp.float32) * 0.01,
    }

    y = residual_adapter(x, params)
    y = jax.block_until_ready(y)

    ref = _reference(x, params)
    assert y.shape == (B, S, D)
    assert jnp.allclose(y, ref, atol=1e-4, rtol=1e-4), "mismatch vs reference"

    print("KERNEL_OK")
</pallas_src>

<mosaic_0001>
module attributes {stable_mosaic.version = 11 : i64} {
  func.func @_adapter_kernel(%arg0: i32, %arg1: memref<16x32xf32, #tpu.memory_space<vmem>>, %arg2: memref<1x32xf32, #tpu.memory_space<vmem>>, %arg3: memref<1x32xf32, #tpu.memory_space<vmem>>, %arg4: memref<32x64xf32, #tpu.memory_space<vmem>>, %arg5: memref<1x64xf32, #tpu.memory_space<vmem>>, %arg6: memref<64x32xf32, #tpu.memory_space<vmem>>, %arg7: memref<1x32xf32, #tpu.memory_space<vmem>>, %arg8: memref<16x32xf32, #tpu.memory_space<vmem>>) attributes {dimension_semantics = [#tpu.dimension_semantics<parallel>], iteration_bounds = array<i64: 1>, scalar_prefetch = 0 : i64, scratch_operands = 0 : i64, tpu.core_type = #tpu.core_type<tc>, window_params = [{transform_indices = @transform_0, window_bounds = array<i64: 16, 32>}, {pipeline_mode = #tpu.pipeline_mode<synchronous>, transform_indices = @transform_1, window_bounds = array<i64: 1, 32>}, {pipeline_mode = #tpu.pipeline_mode<synchronous>, transform_indices = @transform_2, window_bounds = array<i64: 1, 32>}, {pipeline_mode = #tpu.pipeline_mode<synchronous>, transform_indices = @transform_3, window_bounds = array<i64: 32, 64>}, {pipeline_mode = #tpu.pipeline_mode<synchronous>, transform_indices = @transform_4, window_bounds = array<i64: 1, 64>}, {pipeline_mode = #tpu.pipeline_mode<synchronous>, transform_indices = @transform_5, window_bounds = array<i64: 64, 32>}, {pipeline_mode = #tpu.pipeline_mode<synchronous>, transform_indices = @transform_6, window_bounds = array<i64: 1, 32>}, {transform_indices = @transform_7, window_bounds = array<i64: 16, 32>}]} {
    %c0 = arith.constant 0 : index
    %c0_0 = arith.constant 0 : index
    %0 = vector.load %arg1[%c0, %c0_0] : memref<16x32xf32, #tpu.memory_space<vmem>>, vector<16x32xf32>
    %cst = arith.constant dense<0.000000e+00> : vector<16xf32>
    %1 = vector.multi_reduction <add>, %0, %cst [1] : vector<16x32xf32> to vector<16xf32>
    %2 = vector.shape_cast %1 : vector<16xf32> to vector<16x1xf32>
    %cst_1 = arith.constant 3.200000e+01 : f32
    %3 = vector.broadcast %cst_1 : f32 to vector<16x1xf32>
    %4 = arith.divf %2, %3 : vector<16x1xf32>
    %5 = vector.broadcast %4 : vector<16x1xf32> to vector<16x32xf32>
    %6 = arith.subf %0, %5 : vector<16x32xf32>
    %7 = arith.mulf %6, %6 : vector<16x32xf32>
    %cst_2 = arith.constant dense<0.000000e+00> : vector<16xf32>
    %8 = vector.multi_reduction <add>, %7, %cst_2 [1] : vector<16x32xf32> to vector<16xf32>
    %9 = vector.shape_cast %8 : vector<16xf32> to vector<16x1xf32>
    %cst_3 = arith.constant 3.200000e+01 : f32
    %10 = vector.broadcast %cst_3 : f32 to vector<16x1xf32>
    %11 = arith.divf %9, %10 : vector<16x1xf32>
    %cst_4 = arith.constant 9.99999996E-13 : f32
    %12 = vector.broadcast %cst_4 : f32 to vector<16x1xf32>
    %13 = arith.addf %11, %12 : vector<16x1xf32>
    %14 = math.rsqrt %13 : vector<16x1xf32>
    %15 = vector.broadcast %14 : vector<16x1xf32> to vector<16x32xf32>
    %16 = arith.mulf %6, %15 : vector<16x32xf32>
    %c0_5 = arith.constant 0 : index
    %c0_6 = arith.constant 0 : index
    %17 = vector.load %arg2[%c0_5, %c0_6] : memref<1x32xf32, #tpu.memory_space<vmem>>, vector<1x32xf32>
    %18 = vector.broadcast %17 : vector<1x32xf32> to vector<16x32xf32>
    %19 = arith.mulf %16, %18 : vector<16x32xf32>
    %c0_7 = arith.constant 0 : index
    %c0_8 = arith.constant 0 : index
    %20 = vector.load %arg3[%c0_7, %c0_8] : memref<1x32xf32, #tpu.memory_space<vmem>>, vector<1x32xf32>
    %21 = vector.broadcast %20 : vector<1x32xf32> to vector<16x32xf32>
    %22 = arith.addf %19, %21 : vector<16x32xf32>
    %c0_9 = arith.constant 0 : index
    %c0_10 = arith.constant 0 : index
    %23 = vector.load %arg4[%c0_9, %c0_10] : memref<32x64xf32, #tpu.memory_space<vmem>>, vector<32x64xf32>
    %cst_11 = arith.constant dense<0.000000e+00> : vector<16x64xf32>
    %24 = tpu.matmul %22, %23, %cst_11 {dimension_numbers = #tpu.dot_dimension_numbers<[1], [0], [0], [1], [0, 0, 1, 1], [], []>} : vector<16x32xf32>, vector<32x64xf32>, vector<16x64xf32> -> vector<16x64xf32>
    %c0_12 = arith.constant 0 : index
    %c0_13 = arith.constant 0 : index
    %25 = vector.load %arg5[%c0_12, %c0_13] : memref<1x64xf32, #tpu.memory_space<vmem>>, vector<1x64xf32>
    %26 = vector.broadcast %25 : vector<1x64xf32> to vector<16x64xf32>
    %27 = arith.addf %24, %26 : vector<16x64xf32>
    %cst_14 = arith.constant 0.000000e+00 : f32
    %28 = vector.broadcast %cst_14 : f32 to vector<16x64xf32>
    %29 = arith.maximumf %27, %28 : vector<16x64xf32>
    %c0_15 = arith.constant 0 : index
    %c0_16 = arith.constant 0 : index
    %30 = vector.load %arg6[%c0_15, %c0_16] : memref<64x32xf32, #tpu.memory_space<vmem>>, vector<64x32xf32>
    %cst_17 = arith.constant dense<0.000000e+00> : vector<16x32xf32>
    %31 = tpu.matmul %29, %30, %cst_17 {dimension_numbers = #tpu.dot_dimension_numbers<[1], [0], [0], [1], [0, 0, 1, 1], [], []>} : vector<16x64xf32>, vector<64x32xf32>, vector<16x32xf32> -> vector<16x32xf32>
    %c0_18 = arith.constant 0 : index
    %c0_19 = arith.constant 0 : index
    %32 = vector.load %arg7[%c0_18, %c0_19] : memref<1x32xf32, #tpu.memory_space<vmem>>, vector<1x32xf32>
    %33 = vector.broadcast %32 : vector<1x32xf32> to vector<16x32xf32>
    %34 = arith.addf %31, %33 : vector<16x32xf32>
    %35 = arith.addf %34, %0 : vector<16x32xf32>
    %c0_20 = arith.constant 0 : index
    %c0_21 = arith.constant 0 : index
    %36 = vector.load %arg8[%c0_20, %c0_21] : memref<16x32xf32, #tpu.memory_space<vmem>>, vector<16x32xf32>
    tpu.vector_store %arg8[%c0_20, %c0_21], %35 {strides = array<i32>} : memref<16x32xf32, #tpu.memory_space<vmem>>, vector<16x32xf32>,
    return
  }
  func.func @transform_0(%arg0: i32) -> (i32, i32) {
    %c0_i32 = arith.constant 0 : i32
    %c0_i32_0 = arith.constant 0 : i32
    return %arg0, %c0_i32 : i32, i32
  }
  func.func @transform_1(%arg0: i32) -> (i32, i32) {
    %c0_i32 = arith.constant 0 : i32
    %c0_i32_0 = arith.constant 0 : i32
    %c0_i32_1 = arith.constant 0 : i32
    return %c0_i32, %c0_i32_0 : i32, i32
  }
  func.func @transform_2(%arg0: i32) -> (i32, i32) {
    %c0_i32 = arith.constant 0 : i32
    %c0_i32_0 = arith.constant 0 : i32
    %c0_i32_1 = arith.constant 0 : i32
    return %c0_i32, %c0_i32_0 : i32, i32
  }
  func.func @transform_3(%arg0: i32) -> (i32, i32) {
    %c0_i32 = arith.constant 0 : i32
    %c0_i32_0 = arith.constant 0 : i32
    %c0_i32_1 = arith.constant 0 : i32
    return %c0_i32, %c0_i32_0 : i32, i32
  }
  func.func @transform_4(%arg0: i32) -> (i32, i32) {
    %c0_i32 = arith.constant 0 : i32
    %c0_i32_0 = arith.constant 0 : i32
    %c0_i32_1 = arith.constant 0 : i32
    return %c0_i32, %c0_i32_0 : i32, i32
  }
  func.func @transform_5(%arg0: i32) -> (i32, i32) {
    %c0_i32 = arith.constant 0 : i32
    %c0_i32_0 = arith.constant 0 : i32
    %c0_i32_1 = arith.constant 0 : i32
    return %c0_i32, %c0_i32_0 : i32, i32
  }
  func.func @transform_6(%arg0: i32) -> (i32, i32) {
    %c0_i32 = arith.constant 0 : i32
    %c0_i32_0 = arith.constant 0 : i32
    %c0_i32_1 = arith.constant 0 : i32
    return %c0_i32, %c0_i32_0 : i32, i32
  }
  func.func @transform_7(%arg0: i32) -> (i32, i32) {
    %c0_i32 = arith.constant 0 : i32
    %c0_i32_0 = arith.constant 0 : i32
    return %arg0, %c0_i32 : i32, i32
  }
}

</mosaic_0001>

<llo_original>
// kernel: tpu_custom_call.1
$region0: #{tpu_custom_call.1}
  #allocation0 [shape = 'u32[]', space=smem, size = 0x4, offset = 0x4, fixed_abs, tag = 'smem constant byte address 0x4 - core index']
  #allocation1 [shape = 'u32[144,128]{1,0:T(1,128)}', space=vmem, size = 0x12000, scoped, tag = 'internal scratch']
  %s0 = inlined_call_operand.vmem [shape: f32[16,32], index: 0, kind: input, shape index: {}]
  %s1 = inlined_call_operand.vmem [shape: f32[1,32], index: 1, kind: input, shape index: {}]
  %s2 = inlined_call_operand.vmem [shape: f32[1,32], index: 2, kind: input, shape index: {}]
  %s3 = inlined_call_operand.vmem [shape: f32[32,64], index: 3, kind: input, shape index: {}]
  %s4 = inlined_call_operand.vmem [shape: f32[1,64], index: 4, kind: input, shape index: {}]
  %s5 = inlined_call_operand.vmem [shape: f32[64,32], index: 5, kind: input, shape index: {}]
  %s6 = inlined_call_operand.vmem [shape: f32[1,32], index: 6, kind: input, shape index: {}]
  %s7 = inlined_call_operand.hbm [shape: f32[16,32], index: 7, kind: output, shape index: {}]
  %s8 = sld [smem:[#allocation0]]
  $region38: #{tpu_custom_call.1} parent=0
    _
  %s10 = ssub.s32 1, %s8
  %s11 = scalar_select 0, %s10, %s8
  $region1: #{tpu_custom_call.1} parent=0
    #allocation2 [shape = 'u8[8192]{0}', space=vmem, size = 0x2000, scoped, tag = 'output window, operand 0, single buffered']
    #allocation3 [shape = 's32[1]{0}', space=sflag, size = 0x4, scoped, tag = 'scoped memory for tpu_custom_call.1']
    %12 = vsyncpa [#allocation3], 0
    // Predicated region
    $region2: #{tpu_custom_call.1} parent=1 // pred_check
      _
    $region3: #{tpu_custom_call.1} parent=1 // pred_check_branch
      %14 = sbr.rel (0) target = $region5
    $region4: #{tpu_custom_call.1} parent=1 // pred_region
      _
    $region5: #{tpu_custom_call.1} parent=1 // pred_fallthru
      _
    // Predicated region
    $region6: #{tpu_custom_call.1} parent=1 // pred_check
      _
    $region7: #{tpu_custom_call.1} parent=1 // pred_check_branch
      %16 = sbr.rel (0) target = $region9
    $region8: #{tpu_custom_call.1} parent=1 // pred_region
      _
    $region9: #{tpu_custom_call.1} parent=1 // pred_fallthru
      _
    // Predicated region
    $region10: #{tpu_custom_call.1} parent=1 // pred_check
      _
    $region11: #{tpu_custom_call.1} parent=1 // pred_check_branch
      %18 = sbr.rel (0) target = $region13
    $region12: #{tpu_custom_call.1} parent=1 // pred_region
      _
    $region13: #{tpu_custom_call.1} parent=1 // pred_fallthru
      _
    // Predicated region
    $region14: #{tpu_custom_call.1} parent=1 // pred_check
      _
    $region15: #{tpu_custom_call.1} parent=1 // pred_check_branch
      %20 = sbr.rel (0) target = $region17
    $region16: #{tpu_custom_call.1} parent=1 // pred_region
      _
    $region17: #{tpu_custom_call.1} parent=1 // pred_fallthru
      _
    // Predicated region
    $region18: #{tpu_custom_call.1} parent=1 // pred_check
      _
    $region19: #{tpu_custom_call.1} parent=1 // pred_check_branch
      %22 = sbr.rel (0) target = $region21
    $region20: #{tpu_custom_call.1} parent=1 // pred_region
      _
    $region21: #{tpu_custom_call.1} parent=1 // pred_fallthru
      _
    // Predicated region
    $region22: #{tpu_custom_call.1} parent=1 // pred_check
      _
    $region23: #{tpu_custom_call.1} parent=1 // pred_check_branch
      %24 = sbr.rel (0) target = $region25
    $region24: #{tpu_custom_call.1} parent=1 // pred_region
      _
    $region25: #{tpu_custom_call.1} parent=1 // pred_fallthru
      _
    // Predicated region
    $region26: #{tpu_custom_call.1} parent=1 // pred_check
      _
    $region27: #{tpu_custom_call.1} parent=1 // pred_check_branch
      %26 = sbr.rel (0) target = $region29
    $region28: #{tpu_custom_call.1} parent=1 // pred_region
      _
    $region29: #{tpu_custom_call.1} parent=1 // pred_fallthru
      _
    %v27 = vld [vmem:[%s0] sm:$0xff]
    %v28 = vld [vmem:[%s0 + $0x8] sm:$0xff]
    %vm29 = vcmask 261120
    %v30 = vsel %vm29, %v27, 0.0
    %31 = vadd.xlane.f32.xlu0 %v30
    %v32 = vpop.xlane.xlu0 %31
    %v33 = vsel %vm29, %v28, 0.0
    %34 = vadd.xlane.f32.xlu0 %v33
    %v35 = vpop.xlane.xlu0 %34
    %v36 = vrcp.pop 32.0
    %v37 = vmul.f32 %v32, %v36
    %v38 = vmul.f32 %v35, %v36
    %v39 = vsub.f32 %v27, %v37
    %v40 = vsub.f32 %v28, %v38
    %v41 = vmul.f32 %v39, %v39
    %v42 = vmul.f32 %v40, %v40
    %v43 = vsel %vm29, %v41, 0.0
    %44 = vadd.xlane.f32.xlu0 %v43
    %v45 = vpop.xlane.xlu0 %44
    %v46 = vsel %vm29, %v42, 0.0
    %47 = vadd.xlane.f32.xlu0 %v46
    %v48 = vpop.xlane.xlu0 %47
    %v49 = vmul.f32 %v45, %v36
    %v50 = vmul.f32 %v48, %v36
    %v51 = vadd.f32 %v49, 1e-12
    %v52 = vadd.f32 %v50, 1e-12
    %v53 = vrsqrt.pop %v51
    %v54 = vrsqrt.pop %v52
    %v55 = vmul.f32 %v39, %v53
    %v56 = vmul.f32 %v40, %v54
    %v57 = vld [vmem:[%s1] sm:$0x1]
    %v59 = vlaneseq
    %v60 = vshrl.u32 %v59, 7
    %v61 = vsub.s32 0, %v60
    %v62 = vrot.slane %v57, %v61
    %v64 = vmul.f32 %v55, %v62
    %v65 = vmul.f32 %v56, %v62
    %v66 = vld [vmem:[%s2] sm:$0x1]
    %v68 = vlaneseq
    %v69 = vshrl.u32 %v68, 7
    %v70 = vsub.s32 0, %v69
    %v71 = vrot.slane %v66, %v70
    %v73 = vadd.f32 %v64, %v71
    %v74 = vadd.f32 %v65, %v71
    %v75 = vld [vmem:[%s3] sm:$0xff]
    %v76 = vld [vmem:[%s3 + $0x8] sm:$0xff]
    %v77 = vld [vmem:[%s3 + $0x10] sm:$0xff]
    %v78 = vld [vmem:[%s3 + $0x18] sm:$0xff]
    %v79 = vld [vmem:[%s4] sm:$0x1]
    %v81 = vlaneseq
    %v82 = vshrl.u32 %v81, 7
    %v83 = vsub.s32 0, %v82
    %v84 = vrot.slane %v79, %v83
    %v87 = vsel %vm29, %v73, 0
    %v90 = vsel %vm29, %v74, 0
    %92 = vmatprep.subr.mxu0 0.0
    %93 = vmatpush1.msra.mxu0 0.0
    %94 = vmatprep.subr.mxu0 0.0
    %95 = vmatpush1.msra.mxu0 0.0
    %96 = vmatprep.subr.mxu0 0.0
    %97 = vmatpush1.msra.mxu0 0.0
    %98 = vmatprep.subr.mxu0 0.0
    %99 = vmatpush1.msra.mxu0 0.0
    %100 = vmatprep.subr.mxu0 0.0
    %101 = vmatpush1.msra.mxu0 0.0
    %102 = vmatprep.subr.mxu0 0.0
    %103 = vmatpush1.msra.mxu0 0.0
    %104 = vmatprep.subr.mxu0 0.0
    %105 = vmatpush1.msra.mxu0 0.0
    %106 = vmatprep.subr.mxu0 0.0
    %107 = vmatpush1.msra.mxu0 0.0
    %108 = vmatprep.subr.mxu0 0.0
    %109 = vmatpush1.msra.mxu0 0.0
    %110 = vmatprep.subr.mxu0 0.0
    %111 = vmatpush1.msra.mxu0 0.0
    %112 = vmatprep.subr.mxu0 0.0
    %113 = vmatpush1.msra.mxu0 0.0
    %114 = vmatprep.subr.mxu0 0.0
    %115 = vmatpush1.msra.mxu0 0.0
    %116 = vmatprep.subr.mxu0 0.0
    %117 = vmatpush1.msra.mxu0 %v78
    %118 = vmatprep.subr.mxu0 0.0
    %119 = vmatpush1.msra.mxu0 %v77
    %120 = vmatprep.subr.mxu0 0.0
    %121 = vmatpush1.msra.mxu0 %v76
    %122 = vmatprep.subr.mxu0 0.0
    %123 = vmatpush1.msra.mxu0 %v75
    %124 = vmatprep.subr.mxu0 0.0
    %125 = vmatpush2.msra.mxu0 0.0
    %126 = vmatprep.subr.mxu0 0.0
    %127 = vmatpush2.msra.mxu0 0.0
    %128 = vmatprep.subr.mxu0 0.0
    %129 = vmatpush2.msra.mxu0 0.0
    %130 = vmatprep.subr.mxu0 0.0
    %131 = vmatpush2.msra.mxu0 0.0
    %132 = vmatprep.subr.mxu0 0.0
    %133 = vmatpush2.msra.mxu0 0.0
    %134 = vmatprep.subr.mxu0 0.0
    %135 = vmatpush2.msra.mxu0 0.0
    %136 = vmatprep.subr.mxu0 0.0
    %137 = vmatpush2.msra.mxu0 0.0
    %138 = vmatprep.subr.mxu0 0.0
    %139 = vmatpush2.msra.mxu0 0.0
    %140 = vmatprep.subr.mxu0 0.0
    %141 = vmatpush2.msra.mxu0 0.0
    %142 = vmatprep.subr.mxu0 0.0
    %143 = vmatpush2.msra.mxu0 0.0
    %144 = vmatprep.subr.mxu0 0.0
    %145 = vmatpush2.msra.mxu0 0.0
    %146 = vmatprep.subr.mxu0 0.0
    %147 = vmatpush2.msra.mxu0 0.0
    %148 = vmatprep.subr.mxu0 0.0
    %149 = vmatpush2.msra.mxu0 0.0
    %150 = vmatprep.subr.mxu0 0.0
    %151 = vmatpush2.msra.mxu0 0.0
    %152 = vmatprep.subr.mxu0 0.0
    %153 = vmatpush2.msra.mxu0 0.0
    %154 = vmatprep.subr.mxu0 0.0
    %155 = vmatpush2.msra.mxu0 0.0
    %156 = vmatprep.mubr.f32.mxu0 0.0
    %157 = vmatmul.mubr.f32.gmra.mxu0 %v87
    %v158 = vpop.f32.mrf.mxu0
    %v159 = vadd.f32 %v84, %v158
    %v160 = vpop.f32.mrf.mxu0
    %161 = vmatprep.mubr.f32.mxu0 0.0
    %162 = vmatmul.mubr.f32.gmra.mxu0 %v90
    %v163 = vpop.f32.mrf.mxu0
    %v164 = vadd.f32 %v84, %v163
    %v165 = vpop.f32.mrf.mxu0
    %166 = vdwg.mxu0
    %v167 = vmax.f32 %v159, 0.0
    %v168 = vmax.f32 %v164, 0.0
    %v169 = vld [vmem:[%s5] sm:$0xff]
    %v170 = vld [vmem:[%s5 + $0x8] sm:$0xff]
    %v171 = vld [vmem:[%s5 + $0x10] sm:$0xff]
    %v172 = vld [vmem:[%s5 + $0x18] sm:$0xff]
    %v173 = vld [vmem:[%s5 + $0x20] sm:$0xff]
    %v174 = vld [vmem:[%s5 + $0x28] sm:$0xff]
    %v175 = vld [vmem:[%s5 + $0x30] sm:$0xff]
    %v176 = vld [vmem:[%s5 + $0x38] sm:$0xff]
    %v177 = vld [vmem:[%s6] sm:$0x1]
    %v179 = vlaneseq
    %v180 = vshrl.u32 %v179, 7
    %v181 = vsub.s32 0, %v180
    %v182 = vrot.slane %v177, %v181
    %vm184 = vcmask 523264
    %v186 = vsel %vm184, %v167, 0
    %v189 = vsel %vm184, %v168, 0
    %191 = vmatprep.subr.mxu0 0.0
    %192 = vmatpush1.msra.mxu0 0.0
    %193 = vmatprep.subr.mxu0 0.0
    %194 = vmatpush1.msra.mxu0 0.0
    %195 = vmatprep.subr.mxu0 0.0
    %196 = vmatpush1.msra.mxu0 0.0
    %197 = vmatprep.subr.mxu0 0.0
    %198 = vmatpush1.msra.mxu0 0.0
    %199 = vmatprep.subr.mxu0 0.0
    %200 = vmatpush1.msra.mxu0 0.0
    %201 = vmatprep.subr.mxu0 0.0
    %202 = vmatpush1.msra.mxu0 0.0
    %203 = vmatprep.subr.mxu0 0.0
    %204 = vmatpush1.msra.mxu0 0.0
    %205 = vmatprep.subr.mxu0 0.0
    %206 = vmatpush1.msra.mxu0 0.0
    %207 = vmatprep.subr.mxu0 0.0
    %208 = vmatpush1.msra.mxu0 %v176
    %209 = vmatprep.subr.mxu0 0.0
    %210 = vmatpush1.msra.mxu0 %v175
    %211 = vmatprep.subr.mxu0 0.0
    %212 = vmatpush1.msra.mxu0 %v174
    %213 = vmatprep.subr.mxu0 0.0
    %214 = vmatpush1.msra.mxu0 %v173
    %215 = vmatprep.subr.mxu0 0.0
    %216 = vmatpush1.msra.mxu0 %v172
    %217 = vmatprep.subr.mxu0 0.0
    %218 = vmatpush1.msra.mxu0 %v171
    %219 = vmatprep.subr.mxu0 0.0
    %220 = vmatpush1.msra.mxu0 %v170
    %221 = vmatprep.subr.mxu0 0.0
    %222 = vmatpush1.msra.mxu0 %v169
    %223 = vmatprep.subr.mxu0 0.0
    %224 = vmatpush2.msra.mxu0 0.0
    %225 = vmatprep.subr.mxu0 0.0
    %226 = vmatpush2.msra.mxu0 0.0
    %227 = vmatprep.subr.mxu0 0.0
    %228 = vmatpush2.msra.mxu0 0.0
    %229 = vmatprep.subr.mxu0 0.0
    %230 = vmatpush2.msra.mxu0 0.0
    %231 = vmatprep.subr.mxu0 0.0
    %232 = vmatpush2.msra.mxu0 0.0
    %233 = vmatprep.subr.mxu0 0.0
    %234 = vmatpush2.msra.mxu0 0.0
    %235 = vmatprep.subr.mxu0 0.0
    %236 = vmatpush2.msra.mxu0 0.0
    %237 = vmatprep.subr.mxu0 0.0
    %238 = vmatpush2.msra.mxu0 0.0
    %239 = vmatprep.subr.mxu0 0.0
    %240 = vmatpush2.msra.mxu0 0.0
    %241 = vmatprep.subr.mxu0 0.0
    %242 = vmatpush2.msra.mxu0 0.0
    %243 = vmatprep.subr.mxu0 0.0
    %244 = vmatpush2.msra.mxu0 0.0
    %245 = vmatprep.subr.mxu0 0.0
    %246 = vmatpush2.msra.mxu0 0.0
    %247 = vmatprep.subr.mxu0 0.0
    %248 = vmatpush2.msra.mxu0 0.0
    %249 = vmatprep.subr.mxu0 0.0
    %250 = vmatpush2.msra.mxu0 0.0
    %251 = vmatprep.subr.mxu0 0.0
    %252 = vmatpush2.msra.mxu0 0.0
    %253 = vmatprep.subr.mxu0 0.0
    %254 = vmatpush2.msra.mxu0 0.0
    %255 = vmatprep.mubr.f32.mxu0 0.0
    %256 = vmatmul.mubr.f32.gmra.mxu0 %v186
    %v257 = vpop.f32.mrf.mxu0
    %v258 = vadd.f32 %v182, %v257
    %v259 = vpop.f32.mrf.mxu0
    %260 = vmatprep.mubr.f32.mxu0 0.0
    %261 = vmatmul.mubr.f32.gmra.mxu0 %v189
    %v262 = vpop.f32.mrf.mxu0
    %v263 = vadd.f32 %v182, %v262
    %v264 = vpop.f32.mrf.mxu0
    %265 = vdwg.mxu0
    %v266 = vadd.f32 %v258, %v27
    %v267 = vadd.f32 %v263, %v28
    %268 = vst.msk [vmem:[#allocation2] sm:$0xff] %vm29, %v266
    %269 = vst.msk [vmem:[#allocation2 + $0x8] sm:$0xff] %vm29, %v267
    // Predicated region
    $region30: #{tpu_custom_call.1} parent=1 // pred_check
      _
    $region31: #{tpu_custom_call.1} parent=1 // pred_check_branch
      %271 = sbr.rel (0) target = $region33
    $region32: #{tpu_custom_call.1} parent=1 // pred_region
      %s273 = ssub.s32 256, 256
      %274 = vsyncadd [#allocation3], %s273
      %s275 = sshll.u32 [#allocation2], 4
      %s276 = int_to_ptr.vmem [resolvable:$true] %s275
      %281 = dma.vmem_to_hbm [thread:$0]  %s276, 256, %s7, [#allocation3], 128, 128, 8
    $region33: #{tpu_custom_call.1} parent=1 // pred_fallthru
      _
    // Predicated region
    $region34: #{tpu_custom_call.1} parent=1 // pred_check
      _
    $region35: #{tpu_custom_call.1} parent=1 // pred_check_branch
      %283 = sbr.rel (0) target = $region37
    $region36: #{tpu_custom_call.1} parent=1 // pred_region
      %284 = dma.done [#allocation3], 256
    $region37: #{tpu_custom_call.1} parent=1 // pred_fallthru
      _
    %285 = vsyncpa [#allocation3], 1

</llo_original>
